<compile_context>
chip_gen: v5e
topology: v5e:2x2
jax: 0.10.0
libtpu: 0.0.40
codegen_flags: <defaults>
</compile_context>

<pallas_src>
import functools

import jax
import jax.numpy as jnp
from jax.experimental import pallas as pl
from jax.experimental.pallas import tpu as pltpu

LANE = 128  # TPU lane width; the class dimension is zero-padded up to this.


def _round_up(v, m):
    return ((v + m - 1) // m) * m


def _gcn_kernel(x_ref, w_ref, a_ref, out_ref, h_ref, acc_ref, *,
                num_layers, n_pad, tm, tk):
    """Grid = (layer l, row tile i, contraction tile k); l outermost.

    h_ref  : (2 * n_pad, LANE) ping-pong buffer (stream dtype) for H_l / H_{l+1}.
    acc_ref: (tm, LANE) f32 accumulator for the current row tile.
    """
    l = pl.program_id(0)
    i = pl.program_id(1)
    k = pl.program_id(2)
    nk = pl.num_programs(2)

    parity = l % 2
    src = pl.multiple_of(parity * n_pad + k * tk, tk)        # rows of H_l
    dst = pl.multiple_of((1 - parity) * n_pad + i * tm, tm)  # rows of H_{l+1}

    # Layer-0 prologue: materialize H_0 = X @ W chunk-by-chunk into buffer 0
    # while the first row tile walks the k axis.  The grid is sequential, so by
    # the time any i > 0 runs, all of H_0 is already resident.
    @pl.when(jnp.logical_and(l == 0, i == 0))
    def _():
        h0 = jnp.dot(x_ref[...], w_ref[...],
                     preferred_element_type=jnp.float32)
        h_ref[pl.ds(pl.multiple_of(k * tk, tk), tk), :] = h0.astype(h_ref.dtype)

    @pl.when(k == 0)
    def _():
        acc_ref[...] = jnp.zeros_like(acc_ref)

    # Partial propagation: acc += A[i-tile, k-tile] @ H_l[k-tile rows].
    acc_ref[...] += jnp.dot(a_ref[...], h_ref[pl.ds(src, tk), :],
                            preferred_element_type=jnp.float32)

    last_k = k == nk - 1
    last_layer = l == num_layers - 1

    # H_{l+1} is only consumed by the next layer; skip its store on the last.
    @pl.when(jnp.logical_and(last_k, jnp.logical_not(last_layer)))
    def _():
        h_ref[pl.ds(dst, tm), :] = acc_ref[...].astype(h_ref.dtype)

    @pl.when(jnp.logical_and(last_k, last_layer))
    def _():
        out_ref[...] = acc_ref[...].astype(out_ref.dtype)


def build_normalized_adjacency(edge_index, num_nodes, n_pad, dtype):
    """Plain-JAX glue replicating simpleGCN.norm() and densifying the scatter."""
    row, col = edge_index[0], edge_index[1]
    edge_weight = jnp.ones((edge_index.shape[1],), dtype=jnp.float32)
    deg = jax.ops.segment_sum(edge_weight, row, num_segments=num_nodes)
    deg_inv_sqrt = deg ** -0.5
    deg_inv_sqrt = jnp.where(jnp.isinf(deg_inv_sqrt), 0.0, deg_inv_sqrt)
    norm = deg_inv_sqrt[row] * edge_weight * deg_inv_sqrt[col]
    # A[col, row] += norm  so that  A @ h == scatter_add(norm * h[row], col).
    # Padded rows/cols stay zero, so padded nodes never affect real nodes.
    a = jnp.zeros((n_pad, n_pad), jnp.float32).at[col, row].add(norm)
    return a.astype(dtype)


def simple_gcn_forward(x, weight, edge_index, num_layers, *,
                       stream_dtype=jnp.bfloat16, tile=512,
                       resident_budget_bytes=24 * 1024 * 1024):
    assert num_layers >= 1
    assert tile % LANE == 0
    n, f = x.shape
    c = weight.shape[1]
    # TODO(synk): tile the class/lane dimension when num_classes > 128.
    assert c <= LANE

    s_bytes = jnp.dtype(stream_dtype).itemsize
    f_pad = _round_up(max(f, 8), LANE)

    # Prefer keeping the WHOLE normalized adjacency resident in VMEM: its block
    # index is then constant across the grid, so A is DMA'd from HBM exactly
    # once and reused by every layer (A dominates HBM traffic).
    n_small = _round_up(max(n, 8), LANE)
    resident_cost = (2 * n_small * n_small * s_bytes   # A (double-buffered)
                     + 2 * n_small * LANE * s_bytes    # H ping-pong scratch
                     + 2 * n_small * f_pad * 4         # X (double-buffered)
                     + 3 * n_small * LANE * 4)         # acc + out (dbl buf)
    if resident_cost <= resident_budget_bytes:
        n_pad = n_small
        tm = tk = n_pad                                # single A block
    else:
        n_pad = _round_up(max(n, tile), tile)
        tm = tk = tile
    # TODO(synk): spill H to HBM (per-layer calls) when 2*n_pad*LANE exceeds
    # VMEM; the current design keeps H resident across all layers.

    a = build_normalized_adjacency(edge_index, n, n_pad, stream_dtype)
    x_pad = jnp.zeros((n_pad, f_pad), jnp.float32).at[:n, :f].set(
        x.astype(jnp.float32))
    w_pad = jnp.zeros((f_pad, LANE), jnp.float32).at[:f, :c].set(
        weight.astype(jnp.float32))

    ni = n_pad // tm
    nk = n_pad // tk
    grid = (num_layers, ni, nk)
    a_passes = 1 if (ni == 1 and nk == 1) else num_layers

    cost = pl.CostEstimate(
        flops=2 * n_pad * f_pad * LANE + 2 * num_layers * n_pad * n_pad * LANE,
        transcendentals=0,
        bytes_accessed=(a_passes * n_pad * n_pad * s_bytes
                        + n_pad * f_pad * 4 + f_pad * LANE * 4
                        + n_pad * LANE * 4),
    )

    vmem_need = (2 * n_pad * LANE * s_bytes       # H ping-pong scratch
                 + tm * LANE * 4                  # accumulator scratch
                 + 2 * tm * tk * s_bytes          # A tile, double-buffered
                 + 2 * tk * f_pad * 4             # X tile, double-buffered
                 + 2 * f_pad * LANE * 4           # W, double-buffered
                 + 2 * tm * LANE * 4)             # out tile, double-buffered
    vmem_limit = min(max(vmem_need + (4 << 20), 32 << 20), 64 << 20)

    def x_map(l, i, k):
        # X is only consumed while (layer==0, row_tile==0) walks k; afterwards
        # freeze the block index at the last tile visited so the pipeline never
        # re-DMAs it.
        return (jnp.where(jnp.logical_and(l == 0, i == 0), k, nk - 1), 0)

    kernel = functools.partial(_gcn_kernel, num_layers=num_layers,
                               n_pad=n_pad, tm=tm, tk=tk)

    out = pl.pallas_call(
        kernel,
        out_shape=jax.ShapeDtypeStruct((n_pad, LANE), jnp.float32),
        grid_spec=pltpu.PrefetchScalarGridSpec(
            num_scalar_prefetch=0,
            grid=grid,
            in_specs=[
                pl.BlockSpec((tk, f_pad), x_map),                     # X tile
                pl.BlockSpec((f_pad, LANE), lambda l, i, k: (0, 0)),  # W whole
                pl.BlockSpec((tm, tk), lambda l, i, k: (i, k)),       # A tile
            ],
            out_specs=pl.BlockSpec((tm, LANE), lambda l, i, k: (i, 0)),
            scratch_shapes=[
                pltpu.VMEM((2 * n_pad, LANE), stream_dtype),  # H ping-pong
                pltpu.VMEM((tm, LANE), jnp.float32),          # row-tile acc
            ],
        ),
        compiler_params=pltpu.CompilerParams(
            # All axes 'arbitrary': H lives in core-local VMEM scratch and
            # layer l+1 needs EVERY row tile of layer l, so neither the layer
            # nor the row axis can be sharded across TensorCores in this call.
            # TODO(synk): megacore variant (per-layer calls with 'parallel' i).
            dimension_semantics=("arbitrary", "arbitrary", "arbitrary"),
            vmem_limit_bytes=vmem_limit,
        ),
        cost_estimate=cost,
    )(x_pad, w_pad, a)
    return out[:n, :c].astype(x.dtype)


def glorot(key, shape):
    fan_in, fan_out = shape
    limit = (6.0 / (fan_in + fan_out)) ** 0.5
    return jax.random.uniform(key, shape, minval=-limit, maxval=limit,
                              dtype=jnp.float32)


def reference_forward(x, weight, edge_index, num_layers):
    """Pure-JAX reference mirroring the PyTorch scatter/gather path (f32)."""
    n = x.shape[0]
    row, col = edge_index[0], edge_index[1]
    edge_weight = jnp.ones((edge_index.shape[1],), dtype=x.dtype)
    deg = jax.ops.segment_sum(edge_weight, row, num_segments=n)
    deg_inv_sqrt = deg ** -0.5
    deg_inv_sqrt = jnp.where(jnp.isinf(deg_inv_sqrt), 0.0, deg_inv_sqrt)
    norm = (deg_inv_sqrt[row] * edge_weight * deg_inv_sqrt[col])[:, None]
    h = x @ weight
    for _ in range(num_layers):
        h = jax.ops.segment_sum(norm * h[row], col, num_segments=n)
    return h


def make_problem(key, n, f, c, e):
    kx, kw, kr, kc = jax.random.split(key, 4)
    x = jax.random.normal(kx, (n, f), dtype=jnp.float32)
    w = glorot(kw, (f, c))
    row = jax.random.randint(kr, (e,), 0, n, dtype=jnp.int32)
    col = jax.random.randint(kc, (e,), 0, n, dtype=jnp.int32)
    return x, w, jnp.stack([row, col], axis=0)   # edge_index (2, E)


if __name__ == "__main__":
    key = jax.random.PRNGKey(0)
    k1, k2 = jax.random.split(key)

    # 1) Exact path: f32-streamed, A fully VMEM-resident (N=64 padded to 128),
    #    2 layers; A is DMA'd from HBM once and reused by both layers.
    x, w, ei = make_problem(k1, 64, 32, 8, 256)
    out = simple_gcn_forward(x, w, ei, 2, stream_dtype=jnp.float32)
    jax.block_until_ready(out)
    ref = reference_forward(x, w, ei, 2)
    assert out.shape == (64, 8)
    assert jnp.allclose(out, ref, atol=2e-4, rtol=2e-4), "f32 path mismatch"

    # 2) Tiled + bf16-streamed path: residency disabled so N=300 pads to 384
    #    -> 3x3 A tiles, 3 layers (exercises ping-pong parity, k-axis
    #    accumulation and the layer-0 prologue across multiple row tiles).
    #    A and H are bf16 with f32 MXU accumulation, so tolerance is loosened.
    x2, w2, ei2 = make_problem(k2, 300, 32, 8, 1200)
    out2 = simple_gcn_forward(x2, w2, ei2, 3, stream_dtype=jnp.bfloat16,
                              tile=128, resident_budget_bytes=0)
    jax.block_until_ready(out2)
    ref2 = reference_forward(x2, w2, ei2, 3)
    assert out2.shape == (300, 8)
    assert jnp.allclose(out2, ref2, atol=1e-1, rtol=1e-1), "bf16 path mismatch"

    print("KERNEL_OK")
</pallas_src>

<mosaic_0001>
module attributes {stable_mosaic.version = 11 : i64} {
  func.func @_gcn_kernel(%arg0: i32, %arg1: i32, %arg2: i32, %arg3: memref<128x128xf32, #tpu.memory_space<vmem>>, %arg4: memref<128x128xf32, #tpu.memory_space<vmem>>, %arg5: memref<128x128xf32, #tpu.memory_space<vmem>>, %arg6: memref<128x128xf32, #tpu.memory_space<vmem>>, %arg7: memref<256x128xf32, #tpu.memory_space<vmem>>, %arg8: memref<128x128xf32, #tpu.memory_space<vmem>>) attributes {dimension_semantics = [#tpu.dimension_semantics<arbitrary>, #tpu.dimension_semantics<arbitrary>, #tpu.dimension_semantics<arbitrary>], iteration_bounds = array<i64: 2, 1, 1>, scalar_prefetch = 0 : i64, scratch_operands = 2 : i64, tpu.core_type = #tpu.core_type<tc>, window_params = [{transform_indices = @transform_0, window_bounds = array<i64: 128, 128>}, {pipeline_mode = #tpu.pipeline_mode<synchronous>, transform_indices = @transform_1, window_bounds = array<i64: 128, 128>}, {transform_indices = @transform_2, window_bounds = array<i64: 128, 128>}, {transform_indices = @transform_3, window_bounds = array<i64: 128, 128>}]} {
    %c2_i32 = arith.constant 2 : i32
    %c0_i32 = arith.constant 0 : i32
    %0 = arith.cmpi eq, %c2_i32, %c0_i32 : i32
    %c1_i32 = arith.constant 1 : i32
    %1 = arith.select %0, %c1_i32, %c2_i32 : i32
    %2 = arith.remsi %arg0, %1 : i32
    %c0_i32_0 = arith.constant 0 : i32
    %3 = arith.cmpi ne, %2, %c0_i32_0 : i32
    %c0_i32_1 = arith.constant 0 : i32
    %4 = arith.cmpi slt, %2, %c0_i32_1 : i32
    %c0_i32_2 = arith.constant 0 : i32
    %5 = arith.cmpi slt, %1, %c0_i32_2 : i32
    %6 = arith.xori %4, %5 : i1
    %7 = arith.andi %6, %3 : i1
    %8 = arith.addi %2, %1 : i32
    %9 = arith.select %7, %8, %2 : i32
    %c128_i32 = arith.constant 128 : i32
    %10 = arith.muli %9, %c128_i32 : i32
    %c128_i32_3 = arith.constant 128 : i32
    %11 = arith.muli %arg2, %c128_i32_3 : i32
    %12 = arith.addi %10, %11 : i32
    %13 = tpu.assume_multiple %12, 128 : i32
    %c1_i32_4 = arith.constant 1 : i32
    %14 = arith.subi %c1_i32_4, %9 : i32
    %c128_i32_5 = arith.constant 128 : i32
    %15 = arith.muli %14, %c128_i32_5 : i32
    %c128_i32_6 = arith.constant 128 : i32
    %16 = arith.muli %arg1, %c128_i32_6 : i32
    %17 = arith.addi %15, %16 : i32
    %18 = tpu.assume_multiple %17, 128 : i32
    %c0_i32_7 = arith.constant 0 : i32
    %19 = arith.cmpi eq, %arg0, %c0_i32_7 : i32
    %c0_i32_8 = arith.constant 0 : i32
    %20 = arith.cmpi eq, %arg1, %c0_i32_8 : i32
    %21 = arith.andi %19, %20 : i1
    %22 = arith.extui %21 : i1 to i32
    %c0_i32_9 = arith.constant 0 : i32
    %23 = arith.cmpi ne, %22, %c0_i32_9 : i32
    scf.if %23 {
      %c0_22 = arith.constant 0 : index
      %c0_23 = arith.constant 0 : index
      %43 = vector.load %arg3[%c0_22, %c0_23] : memref<128x128xf32, #tpu.memory_space<vmem>>, vector<128x128xf32>
      %c0_24 = arith.constant 0 : index
      %c0_25 = arith.constant 0 : index
      %44 = vector.load %arg4[%c0_24, %c0_25] : memref<128x128xf32, #tpu.memory_space<vmem>>, vector<128x128xf32>
      %cst_26 = arith.constant dense<0.000000e+00> : vector<128x128xf32>
      %45 = tpu.matmul %43, %44, %cst_26 {dimension_numbers = #tpu.dot_dimension_numbers<[1], [0], [0], [1], [0, 0, 1, 1], [], []>} : vector<128x128xf32>, vector<128x128xf32>, vector<128x128xf32> -> vector<128x128xf32>
      %c128_i32_27 = arith.constant 128 : i32
      %46 = arith.muli %arg2, %c128_i32_27 : i32
      %47 = tpu.assume_multiple %46, 128 : i32
      %48 = arith.index_cast %47 : i32 to index
      %c0_28 = arith.constant 0 : index
      %49 = vector.load %arg7[%48, %c0_28] : memref<256x128xf32, #tpu.memory_space<vmem>>, vector<128x128xf32>
      tpu.vector_store %arg7[%48, %c0_28], %45 {strides = array<i32>} : memref<256x128xf32, #tpu.memory_space<vmem>>, vector<128x128xf32>,
    } else {
    }
    %c0_i32_10 = arith.constant 0 : i32
    %24 = arith.cmpi eq, %arg2, %c0_i32_10 : i32
    %25 = arith.extui %24 : i1 to i32
    %c0_i32_11 = arith.constant 0 : i32
    %26 = arith.cmpi ne, %25, %c0_i32_11 : i32
    scf.if %26 {
      %cst_22 = arith.constant 0.000000e+00 : f32
      %43 = vector.broadcast %cst_22 : f32 to vector<128x128xf32>
      %c0_23 = arith.constant 0 : index
      %c0_24 = arith.constant 0 : index
      %44 = vector.load %arg8[%c0_23, %c0_24] : memref<128x128xf32, #tpu.memory_space<vmem>>, vector<128x128xf32>
      tpu.vector_store %arg8[%c0_23, %c0_24], %43 {strides = array<i32>} : memref<128x128xf32, #tpu.memory_space<vmem>>, vector<128x128xf32>,
    } else {
    }
    %c0 = arith.constant 0 : index
    %c0_12 = arith.constant 0 : index
    %27 = vector.load %arg8[%c0, %c0_12] : memref<128x128xf32, #tpu.memory_space<vmem>>, vector<128x128xf32>
    %c0_13 = arith.constant 0 : index
    %c0_14 = arith.constant 0 : index
    %28 = vector.load %arg5[%c0_13, %c0_14] : memref<128x128xf32, #tpu.memory_space<vmem>>, vector<128x128xf32>
    %29 = arith.index_cast %13 : i32 to index
    %c0_15 = arith.constant 0 : index
    %30 = vector.load %arg7[%29, %c0_15] : memref<256x128xf32, #tpu.memory_space<vmem>>, vector<128x128xf32>
    %cst = arith.constant dense<0.000000e+00> : vector<128x128xf32>
    %31 = tpu.matmul %28, %30, %cst {dimension_numbers = #tpu.dot_dimension_numbers<[1], [0], [0], [1], [0, 0, 1, 1], [], []>} : vector<128x128xf32>, vector<128x128xf32>, vector<128x128xf32> -> vector<128x128xf32>
    %32 = arith.addf %27, %31 : vector<128x128xf32>
    %c0_16 = arith.constant 0 : index
    %c0_17 = arith.constant 0 : index
    %33 = vector.load %arg8[%c0_16, %c0_17] : memref<128x128xf32, #tpu.memory_space<vmem>>, vector<128x128xf32>
    tpu.vector_store %arg8[%c0_16, %c0_17], %32 {strides = array<i32>} : memref<128x128xf32, #tpu.memory_space<vmem>>, vector<128x128xf32>,
    %c0_i32_18 = arith.constant 0 : i32
    %34 = arith.cmpi eq, %arg2, %c0_i32_18 : i32
    %c1_i32_19 = arith.constant 1 : i32
    %35 = arith.cmpi eq, %arg0, %c1_i32_19 : i32
    %true = arith.constant true
    %36 = arith.xori %35, %true : i1
    %37 = arith.andi %34, %36 : i1
    %38 = arith.extui %37 : i1 to i32
    %c0_i32_20 = arith.constant 0 : i32
    %39 = arith.cmpi ne, %38, %c0_i32_20 : i32
    scf.if %39 {
      %c0_22 = arith.constant 0 : index
      %c0_23 = arith.constant 0 : index
      %43 = vector.load %arg8[%c0_22, %c0_23] : memref<128x128xf32, #tpu.memory_space<vmem>>, vector<128x128xf32>
      %44 = arith.index_cast %18 : i32 to index
      %c0_24 = arith.constant 0 : index
      %45 = vector.load %arg7[%44, %c0_24] : memref<256x128xf32, #tpu.memory_space<vmem>>, vector<128x128xf32>
      tpu.vector_store %arg7[%44, %c0_24], %43 {strides = array<i32>} : memref<256x128xf32, #tpu.memory_space<vmem>>, vector<128x128xf32>,
    } else {
    }
    %40 = arith.andi %34, %35 : i1
    %41 = arith.extui %40 : i1 to i32
    %c0_i32_21 = arith.constant 0 : i32
    %42 = arith.cmpi ne, %41, %c0_i32_21 : i32
    scf.if %42 {
      %c0_22 = arith.constant 0 : index
      %c0_23 = arith.constant 0 : index
      %43 = vector.load %arg8[%c0_22, %c0_23] : memref<128x128xf32, #tpu.memory_space<vmem>>, vector<128x128xf32>
      %c0_24 = arith.constant 0 : index
      %c0_25 = arith.constant 0 : index
      %44 = vector.load %arg6[%c0_24, %c0_25] : memref<128x128xf32, #tpu.memory_space<vmem>>, vector<128x128xf32>
      tpu.vector_store %arg6[%c0_24, %c0_25], %43 {strides = array<i32>} : memref<128x128xf32, #tpu.memory_space<vmem>>, vector<128x128xf32>,
    } else {
    }
    return
  }
  func.func @transform_0(%arg0: i32, %arg1: i32, %arg2: i32) -> (i32, i32) {
    %c0_i32 = arith.constant 0 : i32
    %0 = arith.cmpi eq, %arg0, %c0_i32 : i32
    %c0_i32_0 = arith.constant 0 : i32
    %1 = arith.cmpi eq, %arg1, %c0_i32_0 : i32
    %2 = arith.andi %0, %1 : i1
    %c0_i32_1 = arith.constant 0 : i32
    %3 = arith.select %2, %arg2, %c0_i32_1 : i32
    %c0_i32_2 = arith.constant 0 : i32
    %c0_i32_3 = arith.constant 0 : i32
    return %3, %c0_i32_2 : i32, i32
  }
  func.func @transform_1(%arg0: i32, %arg1: i32, %arg2: i32) -> (i32, i32) {
    %c0_i32 = arith.constant 0 : i32
    %c0_i32_0 = arith.constant 0 : i32
    %c0_i32_1 = arith.constant 0 : i32
    return %c0_i32, %c0_i32_0 : i32, i32
  }
  func.func @transform_2(%arg0: i32, %arg1: i32, %arg2: i32) -> (i32, i32) {
    %c0_i32 = arith.constant 0 : i32
    return %arg1, %arg2 : i32, i32
  }
  func.func @transform_3(%arg0: i32, %arg1: i32, %arg2: i32) -> (i32, i32) {
    %c0_i32 = arith.constant 0 : i32
    %c0_i32_0 = arith.constant 0 : i32
    return %arg1, %c0_i32 : i32, i32
  }
}

</mosaic_0001>

<llo_original>
// kernel: tpu_custom_call.1
$region0: #{tpu_custom_call.1}
  #allocation0 [shape = 'u32[]', space=smem, size = 0x4, offset = 0x4, fixed_abs, tag = 'smem constant byte address 0x4 - core index']
  #allocation1 [shape = 'u32[72,128]{1,0:T(1,128)}', space=vmem, size = 0x9000, scoped, tag = 'internal scratch']
  #allocation2 [shape = 'f32[256,128]{1,0:T(8,128)}', space=vmem, size = 0x20000, scoped, tag = 'scratch operand']
  #allocation3 [shape = 'f32[128,128]{1,0:T(8,128)}', space=vmem, size = 0x10000, scoped, tag = 'scratch operand']
  %s0 = inlined_call_operand.hbm [shape: f32[128,128], index: 0, kind: input, shape index: {}]
  %s1 = inlined_call_operand.hbm [shape: f32[128,128], index: 1, kind: input, shape index: {}]
  %s2 = inlined_call_operand.hbm [shape: f32[128,128], index: 2, kind: input, shape index: {}]
  %s3 = inlined_call_operand.hbm [shape: f32[128,128], index: 3, kind: output, shape index: {}]
  %s4 = sld [smem:[#allocation0]]
  $region73: #{tpu_custom_call.1} parent=0
    _
  %s6 = ssub.s32 1, %s4
  %s7 = scalar_select 0, %s6, %s4
  $region1: #{tpu_custom_call.1} parent=0
    #allocation4 [shape = 'u8[131072]{0}', space=vmem, size = 0x20000, scoped, tag = 'input window, operand 0']
    #allocation5 [shape = 's32[2]{0}', space=sflag, size = 0x8, scoped, tag = 'scoped memory for tpu_custom_call.1']
    #allocation6 [shape = 's32[2]{0}', space=sflag, size = 0x8, scoped, tag = 'scoped memory for tpu_custom_call.1']
    #allocation7 [shape = 'u8[65536]{0}', space=vmem, size = 0x10000, scoped, tag = 'input window, operand 1, single buffered']
    #allocation8 [shape = 's32[1]{0}', space=sflag, size = 0x4, scoped, tag = 'scoped memory for tpu_custom_call.1']
    #allocation9 [shape = 'u8[65536]{0}', space=vmem, size = 0x10000, scoped, tag = 'input window, operand 2, single buffered']
    #allocation10 [shape = 'u8[65536]{0}', space=vmem, size = 0x10000, scoped, tag = 'output window, operand 0, single buffered']
    %8 = vsyncpa [#allocation5], 0
    %s9 = scalar_lea.sflag [#allocation5], 1
    %10 = vsyncpa %s9, 0
    %11 = vsyncpa [#allocation8], 0
    %12 = vsyncpa [#allocation6], 0
    loop: start=0, step=1, limit=4
    $region2: #{tpu_custom_call.1} parent=1 // loop_pre_header
      _
    $region3: #{tpu_custom_call.1} parent=1 // loop_header
      %s14 = sphi 0, %s18
      %p15 = scmp.ge.s32.totalorder %s14, 4
      %s21 = sphi 0, %s40
      %s22 = sphi 0, %s36
      %s23 = sphi 0, %s32
      %s24 = sphi 0, %s21
      %s25 = sphi 0, %s22
      %s26 = sphi 0, %s23
      %s27 = sphi 0, %s24
      %s28 = sphi 0, %s25
      %s29 = sphi 0, %s26
      %s53 = sphi 0, %s55
      %s56 = sphi 0, %s53
      %s57 = sphi 0, %s56
      %s73 = sphi 0, %s57
      %s77 = sphi 0, %s77
      %s79 = sphi 0, %s77
      %s80 = sphi 0, %s79
      %s94 = sphi 0, %s80
      %s102 = sphi 0, %s104
      %s105 = sphi 0, %s102
      %s106 = sphi 0, %s105
      %s122 = sphi 0, %s106
      %s128 = sphi 0, %s130
      %s131 = sphi 0, %s128
      %s132 = sphi 0, %s131
      %s148 = sphi 0, %s132
    $region4: #{tpu_custom_call.1} parent=1 // loop_header_branch
      %17 = sbr.rel (%p15) target = $region8
    $region5: #{tpu_custom_call.1} parent=1 // loop_body
      %s19 = ssub.s32 %s14, 1
      %s20 = ssub.s32 %s14, 2
      %s30 = sadd.s32 1, %s23
      %p31 = scmp.ge.s32.totalorder %s30, 1
      %s32 = scalar_select %p31, 0, %s30
      %s33 = sadd.s32 1, %s22
      %s34 = scalar_select %p31, %s33, %s22
      %p35 = scmp.ge.s32.totalorder %s34, 1
      %s36 = scalar_select %p35, 0, %s34
      %s37 = sadd.s32 1, %s21
      %s38 = scalar_select %p35, %s37, %s21
      %p39 = scmp.ge.s32.totalorder %s38, 2
      %s40 = scalar_select %p39, 0, %s38
      %p41 = scmp.eq.s32.totalorder %s21, 0
      %p42 = scmp.eq.s32.totalorder %s22, 0
      %p43 = pnand %p41, %p42
      %p44 = pneg %p43
      %s45 = scalar_select %p44, %s23, 0
      %p46 = scmp.eq.s32.totalorder %s40, 0
      %p47 = scmp.eq.s32.totalorder %s36, 0
      %p48 = pnand %p46, %p47
      %p49 = pneg %p48
      %s50 = scalar_select %p49, %s32, 0
      %s51 = ssub.s32 %s45, %s50
      %p52 = scmp.eq.s32.totalorder %s51, 0
      %s54 = sadd.s32 %s53, 1
      %s55 = scalar_select %p52, %s53, %s54
      %p58 = pneg %p52
      %p59 = scmp.eq.s32.totalorder %s14, 1
      %p60 = por %p58, %p59
      %p61 = scmp.ne.s32.totalorder %s53, %s56
      %p62 = scmp.eq.s32.totalorder %s14, 0
      %p63 = por %p61, %p62
      %p64 = scmp.ne.s32.totalorder %s53, %s56
      %p65 = scmp.eq.s32.totalorder %s19, 1
      %p66 = por %p64, %p65
      %p67 = scmp.ne.s32.totalorder %s56, %s57
      %p68 = scmp.eq.s32.totalorder %s19, 0
      %p69 = por %p67, %p68
      %p70 = scmp.ne.s32.totalorder %s56, %s57
      %p71 = scmp.eq.s32.totalorder %s20, 1
      %p72 = por %p70, %p71
      %p74 = scmp.ne.s32.totalorder %s57, %s73
      %p75 = scmp.eq.s32.totalorder %s20, 0
      %p76 = por %p74, %p75
      %s78 = sadd.s32 %s77, 1
      %p81 = scmp.eq.s32.totalorder %s14, 1
      %p82 = scmp.ne.s32.totalorder %s77, %s79
      %p83 = scmp.eq.s32.totalorder %s14, 0
      %p84 = por %p82, %p83
      %p85 = scmp.ne.s32.totalorder %s77, %s79
      %p86 = scmp.eq.s32.totalorder %s19, 1
      %p87 = por %p85, %p86
      %p88 = scmp.ne.s32.totalorder %s79, %s80
      %p89 = scmp.eq.s32.totalorder %s19, 0
      %p90 = por %p88, %p89
      %p91 = scmp.ne.s32.totalorder %s79, %s80
      %p92 = scmp.eq.s32.totalorder %s20, 1
      %p93 = por %p91, %p92
      %p95 = scmp.ne.s32.totalorder %s80, %s94
      %p96 = scmp.eq.s32.totalorder %s20, 0
      %p97 = por %p95, %p96
      %s98 = ssub.s32 %s22, %s36
      %s99 = ssub.s32 %s23, %s32
      %s100 = sor.u32 %s98, %s99
      %p101 = scmp.eq.s32.totalorder %s100, 0
      %s103 = sadd.s32 %s102, 1
      %s104 = scalar_select %p101, %s102, %s103
      %p107 = pneg %p101
      %p108 = scmp.eq.s32.totalorder %s14, 1
      %p109 = por %p107, %p108
      %p110 = scmp.ne.s32.totalorder %s102, %s105
      %p111 = scmp.eq.s32.totalorder %s14, 0
      %p112 = por %p110, %p111
      %p113 = scmp.ne.s32.totalorder %s102, %s105
      %p114 = scmp.eq.s32.totalorder %s19, 1
      %p115 = por %p113, %p114
      %p116 = scmp.ne.s32.totalorder %s105, %s106
      %p117 = scmp.eq.s32.totalorder %s19, 0
      %p118 = por %p116, %p117
      %p119 = scmp.ne.s32.totalorder %s105, %s106
      %p120 = scmp.eq.s32.totalorder %s20, 1
      %p121 = por %p119, %p120
      %p123 = scmp.ne.s32.totalorder %s106, %s122
      %p124 = scmp.eq.s32.totalorder %s20, 0
      %p125 = por %p123, %p124
      %s126 = ssub.s32 %s22, %s36
      %p127 = scmp.eq.s32.totalorder %s126, 0
      %s129 = sadd.s32 %s128, 1
      %s130 = scalar_select %p127, %s128, %s129
      %p133 = pneg %p127
      %p134 = scmp.eq.s32.totalorder %s14, 1
      %p135 = por %p133, %p134
      %p136 = scmp.ne.s32.totalorder %s128, %s131
      %p137 = scmp.eq.s32.totalorder %s14, 0
      %p138 = por %p136, %p137
      %p139 = scmp.ne.s32.totalorder %s128, %s131
      %p140 = scmp.eq.s32.totalorder %s19, 1
      %p141 = por %p139, %p140
      %p142 = scmp.ne.s32.totalorder %s131, %s132
      %p143 = scmp.eq.s32.totalorder %s19, 0
      %p144 = por %p142, %p143
      %p145 = scmp.ne.s32.totalorder %s131, %s132
      %p146 = scmp.eq.s32.totalorder %s20, 1
      %p147 = por %p145, %p146
      %p149 = scmp.ne.s32.totalorder %s132, %s148
      %p150 = scmp.eq.s32.totalorder %s20, 0
      %p151 = por %p149, %p150
      %p152 = scmp.le.s32.totalorder 1, %s14
      %p153 = scmp.lt.s32.totalorder %s14, 3
      %p154 = pnand %p152, %p153
      %p155 = pneg %p154
      // Predicated region
      $region9: #{tpu_custom_call.1} parent=5 // pred_check
        _
      $region10: #{tpu_custom_call.1} parent=5 // pred_check_branch
        %157 = sbr.rel (%p154) target = $region12
      $region11: #{tpu_custom_call.1} parent=5 // pred_region
        %s158 = ssub.s32 %s14, 1
        // Predicated region
        $region13: #{tpu_custom_call.1} parent=11 // pred_check
          %p159 = pneg %p90
        $region14: #{tpu_custom_call.1} parent=11 // pred_check_branch
          %161 = sbr.rel (%p159) target = $region16
        $region15: #{tpu_custom_call.1} parent=11 // pred_region
          %163 = vsyncadd [#allocation8], 0
          %s164 = sshll.u32 %s1, 4
          %s165 = int_to_ptr.hbm [resolvable:$true] %s164
          %s166 = sshll.u32 [#allocation7], 4
          %s167 = int_to_ptr.vmem [resolvable:$true] %s166
          %172 = dma.hbm_to_vmem [thread:$0]  %s165, 2048, %s167, [#allocation8], 128, 128, 8
        $region16: #{tpu_custom_call.1} parent=11 // pred_fallthru
          _
        // Predicated region
        $region17: #{tpu_custom_call.1} parent=11 // pred_check
          %p173 = pneg %p118
        $region18: #{tpu_custom_call.1} parent=11 // pred_check_branch
          %175 = sbr.rel (%p173) target = $region20
        $region19: #{tpu_custom_call.1} parent=11 // pred_region
          %s176 = smul.u32 16, %s25
          %178 = vsyncadd [#allocation8], 0
          %s179 = sadd.s32 %s26, %s176
          %s180 = smul.addr %s179, 8
          %s181 = scalar_lea.hbm %s2, %s180
          %s182 = sshll.u32 %s181, 4
          %s183 = int_to_ptr.hbm [resolvable:$true] %s182
          %s184 = sshll.u32 [#allocation9], 4
          %s185 = int_to_ptr.vmem [resolvable:$true] %s184
          %190 = dma.hbm_to_vmem [thread:$0]  %s183, 2048, %s185, [#allocation8], 128, 128, 8
        $region20: #{tpu_custom_call.1} parent=11 // pred_fallthru
          _
      $region12: #{tpu_custom_call.1} parent=5 // pred_fallthru
        _
      %p191 = scmp.lt.s32.totalorder %s14, 2
      // Predicated region
      $region21: #{tpu_custom_call.1} parent=5 // pred_check
        %p192 = pneg %p191
      $region22: #{tpu_custom_call.1} parent=5 // pred_check_branch
        %194 = sbr.rel (%p192) target = $region24
      $region23: #{tpu_custom_call.1} parent=5 // pred_region
        // Predicated region
        $region25: #{tpu_custom_call.1} parent=23 // pred_check
          %p195 = pneg %p63
        $region26: #{tpu_custom_call.1} parent=23 // pred_check_branch
          %197 = sbr.rel (%p195) target = $region28
        $region27: #{tpu_custom_call.1} parent=23 // pred_region
          %s198 = sand.u32 %s53, 1
          %s199 = scalar_lea.sflag [#allocation5], %s198
          %s200 = sand.u32 %s53, 1
          %s201 = smul.addr %s200, 128
          %s202 = scalar_lea.vmem [#allocation4], %s201
          %p203 = scmp.eq.s32.totalorder %s21, 0
          %p204 = scmp.eq.s32.totalorder %s22, 0
          %p205 = pnand %p203, %p204
          %p206 = pneg %p205
          %s207 = scalar_select %p206, %s23, 0
          %s208 = smul.u32 16, %s207
          %210 = vsyncadd %s199, 0
          %s211 = smul.addr %s208, 8
          %s212 = scalar_lea.hbm %s0, %s211
          %s213 = sshll.u32 %s212, 4
          %s214 = int_to_ptr.hbm [resolvable:$true] %s213
          %s215 = sshll.u32 %s202, 4
          %s216 = int_to_ptr.vmem [resolvable:$true] %s215
          %221 = dma.hbm_to_vmem [thread:$0]  %s214, 2048, %s216, %s199, 128, 128, 8
        $region28: #{tpu_custom_call.1} parent=23 // pred_fallthru
          _
      $region24: #{tpu_custom_call.1} parent=5 // pred_fallthru
        _
      %p222 = scmp.le.s32.totalorder 1, %s14
      %p223 = scmp.lt.s32.totalorder %s14, 3
      %p224 = pnand %p222, %p223
      %p225 = pneg %p224
      // Predicated region
      $region29: #{tpu_custom_call.1} parent=5 // pred_check
        _
      $region30: #{tpu_custom_call.1} parent=5 // pred_check_branch
        %227 = sbr.rel (%p224) target = $region32
      $region31: #{tpu_custom_call.1} parent=5 // pred_region
        %s228 = ssub.s32 %s14, 1
        %s229 = sand.u32 %s56, 1
        %s230 = scalar_lea.sflag [#allocation5], %s229
        %s231 = sand.u32 %s56, 1
        %s232 = smul.addr %s231, 128
        %s233 = scalar_lea.vmem [#allocation4], %s232
        // Predicated region
        $region33: #{tpu_custom_call.1} parent=31 // pred_check
          %p234 = pneg %p69
        $region34: #{tpu_custom_call.1} parent=31 // pred_check_branch
          %236 = sbr.rel (%p234) target = $region36
        $region35: #{tpu_custom_call.1} parent=31 // pred_region
          %238 = dma.done %s230, 2048
        $region36: #{tpu_custom_call.1} parent=31 // pred_fallthru
          _
        // Predicated region
        $region37: #{tpu_custom_call.1} parent=31 // pred_check
          %p239 = pneg %p90
        $region38: #{tpu_custom_call.1} parent=31 // pred_check_branch
          %241 = sbr.rel (%p239) target = $region40
        $region39: #{tpu_custom_call.1} parent=31 // pred_region
          %243 = dma.done [#allocation8], 2048
        $region40: #{tpu_custom_call.1} parent=31 // pred_fallthru
          _
        // Predicated region
        $region41: #{tpu_custom_call.1} parent=31 // pred_check
          %p244 = pneg %p118
        $region42: #{tpu_custom_call.1} parent=31 // pred_check_branch
          %246 = sbr.rel (%p244) target = $region44
        $region43: #{tpu_custom_call.1} parent=31 // pred_region
          %248 = dma.done [#allocation8], 2048
        $region44: #{tpu_custom_call.1} parent=31 // pred_fallthru
          _
        %s249 = sand.u32 %s56, 1
        %s250 = scalar_lea.sflag [#allocation5], %s249
        %s251 = sand.u32 %s56, 1
        %s252 = smul.addr %s251, 128
        %s253 = scalar_lea.vmem [#allocation4], %s252
        %p254 = pneg %p69
        %p255 = pneg %p66
        %p256 = pneg %p90
        %p257 = pneg %p87
        %p258 = pneg %p118
        %p259 = pneg %p115
        %p260 = pneg %p144
        %p261 = pneg %p141
        %p262 = scmp.eq.s32.totalorder %s24, 0
        %p263 = scmp.eq.s32.totalorder %s25, 0
        %p264 = pnand %p262, %p263
        %p265 = pneg %p264
        %s266 = scalar_select %p265, %s26, 0
        %s267 = smul.u32 16, %s266
        %s268 = smul.u32 16, %s25
        %s269 = smul.u32 16, %s25
        %p270 = scmp.lt.s32.totalorder %s24, 0
        %s271 = ssub.s32 0, %s24
        %s272 = scalar_select %p270, %s271, %s24
        %s273 = sand.u32 %s272, 1
        %s274 = ssub.s32 0, %s273
        %s275 = scalar_select %p270, %s274, %s273
        %p276 = scmp.ne.s32.totalorder %s275, 0
        %p277 = scmp.lt.s32.totalorder %s275, 0
        %p278 = pnand %p277, %p276
        %p279 = pneg %p278
        %s280 = sadd.s32 %s275, 2
        %s281 = scalar_select %p279, %s280, %s275
        %s282 = smul.u32 %s281, 128
        %s283 = smul.u32 %s26, 128
        %s284 = sadd.s32 %s282, %s283
        %s285 = ssub.s32 1, %s281
        %s286 = smul.u32 %s285, 128
        %s287 = smul.u32 %s25, 128
        %s288 = sadd.s32 %s286, %s287
        %p289 = scmp.eq.s32.totalorder %s24, 0
        %p290 = scmp.eq.s32.totalorder %s25, 0
        %p291 = pnand %p289, %p290
        %p292 = pneg %p291
        // Predicated region
        $region45: #{tpu_custom_call.1} parent=31 // pred_check
          _
        $region46: #{tpu_custom_call.1} parent=31 // pred_check_branch
          %294 = sbr.rel (%p291) target = $region48
        $region47: #{tpu_custom_call.1} parent=31 // pred_region
          %v295 = vld [vmem:[%s233] sm:$0xff]
          %v296 = vld [vmem:[%s233 + $0x8] sm:$0xff]
          %v297 = vld [vmem:[%s233 + $0x10] sm:$0xff]
          %v298 = vld [vmem:[%s233 + $0x18] sm:$0xff]
          %v299 = vld [vmem:[%s233 + $0x20] sm:$0xff]
          %v300 = vld [vmem:[%s233 + $0x28] sm:$0xff]
          %v301 = vld [vmem:[%s233 + $0x30] sm:$0xff]
          %v302 = vld [vmem:[%s233 + $0x38] sm:$0xff]
          %v303 = vld [vmem:[%s233 + $0x40] sm:$0xff]
          %v304 = vld [vmem:[%s233 + $0x48] sm:$0xff]
          %v305 = vld [vmem:[%s233 + $0x50] sm:$0xff]
          %v306 = vld [vmem:[%s233 + $0x58] sm:$0xff]
          %v307 = vld [vmem:[%s233 + $0x60] sm:$0xff]
          %v308 = vld [vmem:[%s233 + $0x68] sm:$0xff]
          %v309 = vld [vmem:[%s233 + $0x70] sm:$0xff]
          %v310 = vld [vmem:[%s233 + $0x78] sm:$0xff]
          %v311 = vld [vmem:[#allocation7] sm:$0xff]
          %v312 = vld [vmem:[#allocation7 + $0x8] sm:$0xff]
          %v313 = vld [vmem:[#allocation7 + $0x10] sm:$0xff]
          %v314 = vld [vmem:[#allocation7 + $0x18] sm:$0xff]
          %v315 = vld [vmem:[#allocation7 + $0x20] sm:$0xff]
          %v316 = vld [vmem:[#allocation7 + $0x28] sm:$0xff]
          %v317 = vld [vmem:[#allocation7 + $0x30] sm:$0xff]
          %v318 = vld [vmem:[#allocation7 + $0x38] sm:$0xff]
          %v319 = vld [vmem:[#allocation7 + $0x40] sm:$0xff]
          %v320 = vld [vmem:[#allocation7 + $0x48] sm:$0xff]
          %v321 = vld [vmem:[#allocation7 + $0x50] sm:$0xff]
          %v322 = vld [vmem:[#allocation7 + $0x58] sm:$0xff]
          %v323 = vld [vmem:[#allocation7 + $0x60] sm:$0xff]
          %v324 = vld [vmem:[#allocation7 + $0x68] sm:$0xff]
          %v325 = vld [vmem:[#allocation7 + $0x70] sm:$0xff]
          %v326 = vld [vmem:[#allocation7 + $0x78] sm:$0xff]
          %327 = vmatpush.msra.mxu0 %v326
          %328 = vmatpush.msra.mxu0 %v325
          %329 = vmatpush.msra.mxu0 %v324
          %330 = vmatpush.msra.mxu0 %v323
          %331 = vmatpush.msra.mxu0 %v322
          %332 = vmatpush.msra.mxu0 %v321
          %333 = vmatpush.msra.mxu0 %v320
          %334 = vmatpush.msra.mxu0 %v319
          %335 = vmatpush.msra.mxu0 %v318
          %336 = vmatpush.msra.mxu0 %v317
          %337 = vmatpush.msra.mxu0 %v316
          %338 = vmatpush.msra.mxu0 %v315
          %339 = vmatpush.msra.mxu0 %v314
          %340 = vmatpush.msra.mxu0 %v313
          %341 = vmatpush.msra.mxu0 %v312
          %342 = vmatpush.msra.mxu0 %v311
          %343 = vmatmul.f32.gmra.mxu0 %v295
          %v344 = vpop.f32.mrf.mxu0
          %v345 = vadd.f32 0.0, %v344
          %346 = vmatmul.f32.gmra.mxu0 %v296
          %v347 = vpop.f32.mrf.mxu0
          %v348 = vadd.f32 0.0, %v347
          %349 = vmatmul.f32.gmra.mxu0 %v297
          %v350 = vpop.f32.mrf.mxu0
          %v351 = vadd.f32 0.0, %v350
          %352 = vmatmul.f32.gmra.mxu0 %v298
          %v353 = vpop.f32.mrf.mxu0
          %v354 = vadd.f32 0.0, %v353
          %355 = vmatmul.f32.gmra.mxu0 %v299
          %v356 = vpop.f32.mrf.mxu0
          %v357 = vadd.f32 0.0, %v356
          %358 = vmatmul.f32.gmra.mxu0 %v300
          %v359 = vpop.f32.mrf.mxu0
          %v360 = vadd.f32 0.0, %v359
          %361 = vmatmul.f32.gmra.mxu0 %v301
          %v362 = vpop.f32.mrf.mxu0
          %v363 = vadd.f32 0.0, %v362
          %364 = vmatmul.f32.gmra.mxu0 %v302
          %v365 = vpop.f32.mrf.mxu0
          %v366 = vadd.f32 0.0, %v365
          %367 = vmatmul.f32.gmra.mxu0 %v303
          %v368 = vpop.f32.mrf.mxu0
          %v369 = vadd.f32 0.0, %v368
          %370 = vmatmul.f32.gmra.mxu0 %v304
          %v371 = vpop.f32.mrf.mxu0
          %v372 = vadd.f32 0.0, %v371
          %373 = vmatmul.f32.gmra.mxu0 %v305
          %v374 = vpop.f32.mrf.mxu0
          %v375 = vadd.f32 0.0, %v374
          %376 = vmatmul.f32.gmra.mxu0 %v306
          %v377 = vpop.f32.mrf.mxu0
          %v378 = vadd.f32 0.0, %v377
          %379 = vmatmul.f32.gmra.mxu0 %v307
          %v380 = vpop.f32.mrf.mxu0
          %v381 = vadd.f32 0.0, %v380
          %382 = vmatmul.f32.gmra.mxu0 %v308
          %v383 = vpop.f32.mrf.mxu0
          %v384 = vadd.f32 0.0, %v383
          %385 = vmatmul.f32.gmra.mxu0 %v309
          %v386 = vpop.f32.mrf.mxu0
          %v387 = vadd.f32 0.0, %v386
          %388 = vmatmul.f32.gmra.mxu0 %v310
          %v389 = vpop.f32.mrf.mxu0
          %v390 = vadd.f32 0.0, %v389
          %391 = vdwg.mxu0
          %s392 = scalar_lea.vmem [#allocation2], %s283
          %393 = vst [vmem:[%s392] sm:$0xff] %v345
          %394 = vst [vmem:[%s392 + $0x8] sm:$0xff] %v348
          %395 = vst [vmem:[%s392 + $0x10] sm:$0xff] %v351
          %396 = vst [vmem:[%s392 + $0x18] sm:$0xff] %v354
          %397 = vst [vmem:[%s392 + $0x20] sm:$0xff] %v357
          %398 = vst [vmem:[%s392 + $0x28] sm:$0xff] %v360
          %399 = vst [vmem:[%s392 + $0x30] sm:$0xff] %v363
          %400 = vst [vmem:[%s392 + $0x38] sm:$0xff] %v366
          %401 = vst [vmem:[%s392 + $0x40] sm:$0xff] %v369
          %402 = vst [vmem:[%s392 + $0x48] sm:$0xff] %v372
          %403 = vst [vmem:[%s392 + $0x50] sm:$0xff] %v375
          %404 = vst [vmem:[%s392 + $0x58] sm:$0xff] %v378
          %405 = vst [vmem:[%s392 + $0x60] sm:$0xff] %v381
          %406 = vst [vmem:[%s392 + $0x68] sm:$0xff] %v384
          %407 = vst [vmem:[%s392 + $0x70] sm:$0xff] %v387
          %408 = vst [vmem:[%s392 + $0x78] sm:$0xff] %v390
        $region48: #{tpu_custom_call.1} parent=31 // pred_fallthru
          _
        %p409 = scmp.eq.s32.totalorder %s26, 0
        // Predicated region
        $region49: #{tpu_custom_call.1} parent=31 // pred_check
          %p410 = pneg %p409
        $region50: #{tpu_custom_call.1} parent=31 // pred_check_branch
          %412 = sbr.rel (%p410) target = $region52
        $region51: #{tpu_custom_call.1} parent=31 // pred_region
          %413 = vst [vmem:[#allocation3] sm:$0xff] 0.0
          %414 = vst [vmem:[#allocation3 + $0x8] sm:$0xff] 0.0
          %415 = vst [vmem:[#allocation3 + $0x10] sm:$0xff] 0.0
          %416 = vst [vmem:[#allocation3 + $0x18] sm:$0xff] 0.0
          %417 = vst [vmem:[#allocation3 + $0x20] sm:$0xff] 0.0
          %418 = vst [vmem:[#allocation3 + $0x28] sm:$0xff] 0.0
          %419 = vst [vmem:[#allocation3 + $0x30] sm:$0xff] 0.0
          %420 = vst [vmem:[#allocation3 + $0x38] sm:$0xff] 0.0
          %421 = vst [vmem:[#allocation3 + $0x40] sm:$0xff] 0.0
          %422 = vst [vmem:[#allocation3 + $0x48] sm:$0xff] 0.0
          %423 = vst [vmem:[#allocation3 + $0x50] sm:$0xff] 0.0
          %424 = vst [vmem:[#allocation3 + $0x58] sm:$0xff] 0.0
          %425 = vst [vmem:[#allocation3 + $0x60] sm:$0xff] 0.0
          %426 = vst [vmem:[#allocation3 + $0x68] sm:$0xff] 0.0
          %427 = vst [vmem:[#allocation3 + $0x70] sm:$0xff] 0.0
          %428 = vst [vmem:[#allocation3 + $0x78] sm:$0xff] 0.0
        $region52: #{tpu_custom_call.1} parent=31 // pred_fallthru
          _
        %v429 = vld [vmem:[#allocation3] sm:$0xff]
        %v430 = vld [vmem:[#allocation3 + $0x8] sm:$0xff]
        %v431 = vld [vmem:[#allocation3 + $0x10] sm:$0xff]
        %v432 = vld [vmem:[#allocation3 + $0x18] sm:$0xff]
        %v433 = vld [vmem:[#allocation3 + $0x20] sm:$0xff]
        %v434 = vld [vmem:[#allocation3 + $0x28] sm:$0xff]
        %v435 = vld [vmem:[#allocation3 + $0x30] sm:$0xff]
        %v436 = vld [vmem:[#allocation3 + $0x38] sm:$0xff]
        %v437 = vld [vmem:[#allocation3 + $0x40] sm:$0xff]
        %v438 = vld [vmem:[#allocation3 + $0x48] sm:$0xff]
        %v439 = vld [vmem:[#allocation3 + $0x50] sm:$0xff]
        %v440 = vld [vmem:[#allocation3 + $0x58] sm:$0xff]
        %v441 = vld [vmem:[#allocation3 + $0x60] sm:$0xff]
        %v442 = vld [vmem:[#allocation3 + $0x68] sm:$0xff]
        %v443 = vld [vmem:[#allocation3 + $0x70] sm:$0xff]
        %v444 = vld [vmem:[#allocation3 + $0x78] sm:$0xff]
        %v445 = vld [vmem:[#allocation9] sm:$0xff]
        %v446 = vld [vmem:[#allocation9 + $0x8] sm:$0xff]
        %v447 = vld [vmem:[#allocation9 + $0x10] sm:$0xff]
        %v448 = vld [vmem:[#allocation9 + $0x18] sm:$0xff]
        %v449 = vld [vmem:[#allocation9 + $0x20] sm:$0xff]
        %v450 = vld [vmem:[#allocation9 + $0x28] sm:$0xff]
        %v451 = vld [vmem:[#allocation9 + $0x30] sm:$0xff]
        %v452 = vld [vmem:[#allocation9 + $0x38] sm:$0xff]
        %v453 = vld [vmem:[#allocation9 + $0x40] sm:$0xff]
        %v454 = vld [vmem:[#allocation9 + $0x48] sm:$0xff]
        %v455 = vld [vmem:[#allocation9 + $0x50] sm:$0xff]
        %v456 = vld [vmem:[#allocation9 + $0x58] sm:$0xff]
        %v457 = vld [vmem:[#allocation9 + $0x60] sm:$0xff]
        %v458 = vld [vmem:[#allocation9 + $0x68] sm:$0xff]
        %v459 = vld [vmem:[#allocation9 + $0x70] sm:$0xff]
        %v460 = vld [vmem:[#allocation9 + $0x78] sm:$0xff]
        %s461 = scalar_lea.vmem [#allocation2], %s284
        %v462 = vld [vmem:[%s461] sm:$0xff]
        %v463 = vld [vmem:[%s461 + $0x8] sm:$0xff]
        %v464 = vld [vmem:[%s461 + $0x10] sm:$0xff]
        %v465 = vld [vmem:[%s461 + $0x18] sm:$0xff]
        %v466 = vld [vmem:[%s461 + $0x20] sm:$0xff]
        %v467 = vld [vmem:[%s461 + $0x28] sm:$0xff]
        %v468 = vld [vmem:[%s461 + $0x30] sm:$0xff]
        %v469 = vld [vmem:[%s461 + $0x38] sm:$0xff]
        %v470 = vld [vmem:[%s461 + $0x40] sm:$0xff]
        %v471 = vld [vmem:[%s461 + $0x48] sm:$0xff]
        %v472 = vld [vmem:[%s461 + $0x50] sm:$0xff]
        %v473 = vld [vmem:[%s461 + $0x58] sm:$0xff]
        %v474 = vld [vmem:[%s461 + $0x60] sm:$0xff]
        %v475 = vld [vmem:[%s461 + $0x68] sm:$0xff]
        %v476 = vld [vmem:[%s461 + $0x70] sm:$0xff]
        %v477 = vld [vmem:[%s461 + $0x78] sm:$0xff]
        %478 = vmatpush.msra.mxu0 %v477
        %479 = vmatpush.msra.mxu0 %v476
        %480 = vmatpush.msra.mxu0 %v475
        %481 = vmatpush.msra.mxu0 %v474
        %482 = vmatpush.msra.mxu0 %v473
        %483 = vmatpush.msra.mxu0 %v472
        %484 = vmatpush.msra.mxu0 %v471
        %485 = vmatpush.msra.mxu0 %v470
        %486 = vmatpush.msra.mxu0 %v469
        %487 = vmatpush.msra.mxu0 %v468
        %488 = vmatpush.msra.mxu0 %v467
        %489 = vmatpush.msra.mxu0 %v466
        %490 = vmatpush.msra.mxu0 %v465
        %491 = vmatpush.msra.mxu0 %v464
        %492 = vmatpush.msra.mxu0 %v463
        %493 = vmatpush.msra.mxu0 %v462
        %494 = vmatmul.f32.gmra.mxu0 %v445
        %v495 = vpop.f32.mrf.mxu0
        %v496 = vadd.f32 0.0, %v495
        %497 = vmatmul.f32.gmra.mxu0 %v446
        %v498 = vpop.f32.mrf.mxu0
        %v499 = vadd.f32 0.0, %v498
        %500 = vmatmul.f32.gmra.mxu0 %v447
        %v501 = vpop.f32.mrf.mxu0
        %v502 = vadd.f32 0.0, %v501
        %503 = vmatmul.f32.gmra.mxu0 %v448
        %v504 = vpop.f32.mrf.mxu0
        %v505 = vadd.f32 0.0, %v504
        %506 = vmatmul.f32.gmra.mxu0 %v449
        %v507 = vpop.f32.mrf.mxu0
        %v508 = vadd.f32 0.0, %v507
        %509 = vmatmul.f32.gmra.mxu0 %v450
        %v510 = vpop.f32.mrf.mxu0
        %v511 = vadd.f32 0.0, %v510
        %512 = vmatmul.f32.gmra.mxu0 %v451
        %v513 = vpop.f32.mrf.mxu0
        %v514 = vadd.f32 0.0, %v513
        %515 = vmatmul.f32.gmra.mxu0 %v452
        %v516 = vpop.f32.mrf.mxu0
        %v517 = vadd.f32 0.0, %v516
        %518 = vmatmul.f32.gmra.mxu0 %v453
        %v519 = vpop.f32.mrf.mxu0
        %v520 = vadd.f32 0.0, %v519
        %521 = vmatmul.f32.gmra.mxu0 %v454
        %v522 = vpop.f32.mrf.mxu0
        %v523 = vadd.f32 0.0, %v522
        %524 = vmatmul.f32.gmra.mxu0 %v455
        %v525 = vpop.f32.mrf.mxu0
        %v526 = vadd.f32 0.0, %v525
        %527 = vmatmul.f32.gmra.mxu0 %v456
        %v528 = vpop.f32.mrf.mxu0
        %v529 = vadd.f32 0.0, %v528
        %530 = vmatmul.f32.gmra.mxu0 %v457
        %v531 = vpop.f32.mrf.mxu0
        %v532 = vadd.f32 0.0, %v531
        %533 = vmatmul.f32.gmra.mxu0 %v458
        %v534 = vpop.f32.mrf.mxu0
        %v535 = vadd.f32 0.0, %v534
        %536 = vmatmul.f32.gmra.mxu0 %v459
        %v537 = vpop.f32.mrf.mxu0
        %v538 = vadd.f32 0.0, %v537
        %539 = vmatmul.f32.gmra.mxu0 %v460
        %v540 = vpop.f32.mrf.mxu0
        %v541 = vadd.f32 0.0, %v540
        %542 = vdwg.mxu0
        %v543 = vadd.f32 %v429, %v496
        %v544 = vadd.f32 %v430, %v499
        %v545 = vadd.f32 %v431, %v502
        %v546 = vadd.f32 %v432, %v505
        %v547 = vadd.f32 %v433, %v508
        %v548 = vadd.f32 %v434, %v511
        %v549 = vadd.f32 %v435, %v514
        %v550 = vadd.f32 %v436, %v517
        %v551 = vadd.f32 %v437, %v520
        %v552 = vadd.f32 %v438, %v523
        %v553 = vadd.f32 %v439, %v526
        %v554 = vadd.f32 %v440, %v529
        %v555 = vadd.f32 %v441, %v532
        %v556 = vadd.f32 %v442, %v535
        %v557 = vadd.f32 %v443, %v538
        %v558 = vadd.f32 %v444, %v541
        %559 = vst [vmem:[#allocation3] sm:$0xff] %v543
        %560 = vst [vmem:[#allocation3 + $0x8] sm:$0xff] %v544
        %561 = vst [vmem:[#allocation3 + $0x10] sm:$0xff] %v545
        %562 = vst [vmem:[#allocation3 + $0x18] sm:$0xff] %v546
        %563 = vst [vmem:[#allocation3 + $0x20] sm:$0xff] %v547
        %564 = vst [vmem:[#allocation3 + $0x28] sm:$0xff] %v548
        %565 = vst [vmem:[#allocation3 + $0x30] sm:$0xff] %v549
        %566 = vst [vmem:[#allocation3 + $0x38] sm:$0xff] %v550
        %567 = vst [vmem:[#allocation3 + $0x40] sm:$0xff] %v551
        %568 = vst [vmem:[#allocation3 + $0x48] sm:$0xff] %v552
        %569 = vst [vmem:[#allocation3 + $0x50] sm:$0xff] %v553
        %570 = vst [vmem:[#allocation3 + $0x58] sm:$0xff] %v554
        %571 = vst [vmem:[#allocation3 + $0x60] sm:$0xff] %v555
        %572 = vst [vmem:[#allocation3 + $0x68] sm:$0xff] %v556
        %573 = vst [vmem:[#allocation3 + $0x70] sm:$0xff] %v557
        %574 = vst [vmem:[#allocation3 + $0x78] sm:$0xff] %v558
        %p575 = scmp.eq.s32.totalorder %s24, 1
        %p576 = scmp.ne.s32.totalorder %s24, 1
        %p577 = pnand %p409, %p576
        %p578 = pneg %p577
        // Predicated region
        $region53: #{tpu_custom_call.1} parent=31 // pred_check
          _
        $region54: #{tpu_custom_call.1} parent=31 // pred_check_branch
          %580 = sbr.rel (%p577) target = $region56
        $region55: #{tpu_custom_call.1} parent=31 // pred_region
          %v581 = vld [vmem:[#allocation3] sm:$0xff]
          %v582 = vld [vmem:[#allocation3 + $0x8] sm:$0xff]
          %v583 = vld [vmem:[#allocation3 + $0x10] sm:$0xff]
          %v584 = vld [vmem:[#allocation3 + $0x18] sm:$0xff]
          %v585 = vld [vmem:[#allocation3 + $0x20] sm:$0xff]
          %v586 = vld [vmem:[#allocation3 + $0x28] sm:$0xff]
          %v587 = vld [vmem:[#allocation3 + $0x30] sm:$0xff]
          %v588 = vld [vmem:[#allocation3 + $0x38] sm:$0xff]
          %v589 = vld [vmem:[#allocation3 + $0x40] sm:$0xff]
          %v590 = vld [vmem:[#allocation3 + $0x48] sm:$0xff]
          %v591 = vld [vmem:[#allocation3 + $0x50] sm:$0xff]
          %v592 = vld [vmem:[#allocation3 + $0x58] sm:$0xff]
          %v593 = vld [vmem:[#allocation3 + $0x60] sm:$0xff]
          %v594 = vld [vmem:[#allocation3 + $0x68] sm:$0xff]
          %v595 = vld [vmem:[#allocation3 + $0x70] sm:$0xff]
          %v596 = vld [vmem:[#allocation3 + $0x78] sm:$0xff]
          %s597 = scalar_lea.vmem [#allocation2], %s288
          %598 = vst [vmem:[%s597] sm:$0xff] %v581
          %599 = vst [vmem:[%s597 + $0x8] sm:$0xff] %v582
          %600 = vst [vmem:[%s597 + $0x10] sm:$0xff] %v583
          %601 = vst [vmem:[%s597 + $0x18] sm:$0xff] %v584
          %602 = vst [vmem:[%s597 + $0x20] sm:$0xff] %v585
          %603 = vst [vmem:[%s597 + $0x28] sm:$0xff] %v586
          %604 = vst [vmem:[%s597 + $0x30] sm:$0xff] %v587
          %605 = vst [vmem:[%s597 + $0x38] sm:$0xff] %v588
          %606 = vst [vmem:[%s597 + $0x40] sm:$0xff] %v589
          %607 = vst [vmem:[%s597 + $0x48] sm:$0xff] %v590
          %608 = vst [vmem:[%s597 + $0x50] sm:$0xff] %v591
          %609 = vst [vmem:[%s597 + $0x58] sm:$0xff] %v592
          %610 = vst [vmem:[%s597 + $0x60] sm:$0xff] %v593
          %611 = vst [vmem:[%s597 + $0x68] sm:$0xff] %v594
          %612 = vst [vmem:[%s597 + $0x70] sm:$0xff] %v595
          %613 = vst [vmem:[%s597 + $0x78] sm:$0xff] %v596
        $region56: #{tpu_custom_call.1} parent=31 // pred_fallthru
          _
        %p614 = pnand %p409, %p575
        %p615 = pneg %p614
        // Predicated region
        $region57: #{tpu_custom_call.1} parent=31 // pred_check
          _
        $region58: #{tpu_custom_call.1} parent=31 // pred_check_branch
          %617 = sbr.rel (%p614) target = $region60
        $region59: #{tpu_custom_call.1} parent=31 // pred_region
          %v618 = vld [vmem:[#allocation3] sm:$0xff]
          %v619 = vld [vmem:[#allocation3 + $0x8] sm:$0xff]
          %v620 = vld [vmem:[#allocation3 + $0x10] sm:$0xff]
          %v621 = vld [vmem:[#allocation3 + $0x18] sm:$0xff]
          %v622 = vld [vmem:[#allocation3 + $0x20] sm:$0xff]
          %v623 = vld [vmem:[#allocation3 + $0x28] sm:$0xff]
          %v624 = vld [vmem:[#allocation3 + $0x30] sm:$0xff]
          %v625 = vld [vmem:[#allocation3 + $0x38] sm:$0xff]
          %v626 = vld [vmem:[#allocation3 + $0x40] sm:$0xff]
          %v627 = vld [vmem:[#allocation3 + $0x48] sm:$0xff]
          %v628 = vld [vmem:[#allocation3 + $0x50] sm:$0xff]
          %v629 = vld [vmem:[#allocation3 + $0x58] sm:$0xff]
          %v630 = vld [vmem:[#allocation3 + $0x60] sm:$0xff]
          %v631 = vld [vmem:[#allocation3 + $0x68] sm:$0xff]
          %v632 = vld [vmem:[#allocation3 + $0x70] sm:$0xff]
          %v633 = vld [vmem:[#allocation3 + $0x78] sm:$0xff]
          %634 = vst [vmem:[#allocation10] sm:$0xff] %v618
          %635 = vst [vmem:[#allocation10 + $0x8] sm:$0xff] %v619
          %636 = vst [vmem:[#allocation10 + $0x10] sm:$0xff] %v620
          %637 = vst [vmem:[#allocation10 + $0x18] sm:$0xff] %v621
          %638 = vst [vmem:[#allocation10 + $0x20] sm:$0xff] %v622
          %639 = vst [vmem:[#allocation10 + $0x28] sm:$0xff] %v623
          %640 = vst [vmem:[#allocation10 + $0x30] sm:$0xff] %v624
          %641 = vst [vmem:[#allocation10 + $0x38] sm:$0xff] %v625
          %642 = vst [vmem:[#allocation10 + $0x40] sm:$0xff] %v626
          %643 = vst [vmem:[#allocation10 + $0x48] sm:$0xff] %v627
          %644 = vst [vmem:[#allocation10 + $0x50] sm:$0xff] %v628
          %645 = vst [vmem:[#allocation10 + $0x58] sm:$0xff] %v629
          %646 = vst [vmem:[#allocation10 + $0x60] sm:$0xff] %v630
          %647 = vst [vmem:[#allocation10 + $0x68] sm:$0xff] %v631
          %648 = vst [vmem:[#allocation10 + $0x70] sm:$0xff] %v632
          %649 = vst [vmem:[#allocation10 + $0x78] sm:$0xff] %v633
        $region60: #{tpu_custom_call.1} parent=31 // pred_fallthru
          _
        // Predicated region
        $region61: #{tpu_custom_call.1} parent=31 // pred_check
          %p650 = pneg %p141
        $region62: #{tpu_custom_call.1} parent=31 // pred_check_branch
          %652 = sbr.rel (%p650) target = $region64
        $region63: #{tpu_custom_call.1} parent=31 // pred_region
          %s653 = smul.u32 16, %s25
          %655 = vsyncadd [#allocation6], 0
          %s656 = smul.addr %s653, 8
          %s657 = scalar_lea.hbm %s3, %s656
          %s658 = sshll.u32 [#allocation10], 4
          %s659 = int_to_ptr.vmem [resolvable:$true] %s658
          %s660 = sshll.u32 %s657, 4
          %s661 = int_to_ptr.hbm [resolvable:$true] %s660
          %666 = dma.vmem_to_hbm [thread:$0]  %s659, 2048, %s661, [#allocation6], 128, 128, 8
        $region64: #{tpu_custom_call.1} parent=31 // pred_fallthru
          _
        // Predicated region
        $region65: #{tpu_custom_call.1} parent=31 // pred_check
          %p667 = pneg %p141
        $region66: #{tpu_custom_call.1} parent=31 // pred_check_branch
          %669 = sbr.rel (%p667) target = $region68
        $region67: #{tpu_custom_call.1} parent=31 // pred_region
          %671 = dma.done [#allocation6], 2048
        $region68: #{tpu_custom_call.1} parent=31 // pred_fallthru
          _
      $region32: #{tpu_custom_call.1} parent=5 // pred_fallthru
        _
      %p672 = scmp.le.s32.totalorder 2, %s14
      // Predicated region
      $region69: #{tpu_custom_call.1} parent=5 // pred_check
        %p673 = pneg %p672
      $region70: #{tpu_custom_call.1} parent=5 // pred_check_branch
        %675 = sbr.rel (%p673) target = $region72
      $region71: #{tpu_custom_call.1} parent=5 // pred_region
        %s676 = ssub.s32 %s14, 2
      $region72: #{tpu_custom_call.1} parent=5 // pred_fallthru
        _
    $region6: #{tpu_custom_call.1} parent=1 // loop_footer
      %s18 = sadd.s32 1, %s14
    $region7: #{tpu_custom_call.1} parent=1 // loop_footer_branch
      %13 = sbr.rel target = $region3
    $region8: #{tpu_custom_call.1} parent=1 // loop_exit
      _
    %677 = vsyncpa [#allocation5], 1
    %s678 = scalar_lea.sflag [#allocation5], 1
    %679 = vsyncpa %s678, 1
    %680 = vsyncpa [#allocation8], 1
    %681 = vsyncpa [#allocation6], 1
    %s682 = scalar_lea.sflag [#allocation6], 1
    %683 = vsyncpa %s682, 1

</llo_original>
